<compile_context>
chip_gen: v7x
topology: tpu7x:2x2x1
jax: 0.10.0
libtpu: 0.0.40
codegen_flags: <defaults>
</compile_context>

<pallas_src>
import functools

import jax
import jax.numpy as jnp
from jax.experimental import pallas as pl
from jax.experimental.pallas import tpu as pltpu


def _int_pow(x, n):
    """x**n for small positive integer n using only VPU multiplies."""
    result = None
    base = x
    while n > 0:
        if n & 1:
            result = base if result is None else result * base
        n >>= 1
        if n:
            base = base * base
    return result


def _gem_kernel(x_ref, o_ref, *, p, eps, inv_hw):
    # x_ref: (tile_rows, HW)   o_ref: (1, tile_rows)  (lane-dense output)
    x = x_ref[...].astype(jnp.float32)
    x = jnp.maximum(x, eps)                    # clamp(min=eps)

    p_int = int(round(p))
    if abs(p - p_int) < 1e-12 and 1 <= p_int <= 16:
        xp = _int_pow(x, p_int)                # VPU multiplies (p=3 -> x*x*x)
    else:
        xp = x ** p                            # generic p: EUP exp/log

    s = jnp.sum(xp, axis=-1)                   # (tile_rows,) per-row spatial sum
    m = s * inv_hw                             # adaptive_avg_pool2d(., 1)
    y = m ** (1.0 / p)                         # per-row root (only `rows` transcendentals)
    o_ref[0, :] = y.astype(o_ref.dtype)        # lane-dense store


def generalized_mean_pooling(x, p=3.0, eps=1e-6, *,
                             target_block_bytes=4 * 1024 * 1024):
    """x: (N, C, H, W) -> (N, C, 1, 1), GeM pooling with output_size=1."""
    n, c, h, w = x.shape
    rows = n * c
    hw = h * w
    x2d = x.reshape(rows, hw)

    itemsize = jnp.dtype(x.dtype).itemsize
    sublane = {4: 8, 2: 16, 1: 32}.get(itemsize, 8)   # dtype-aware sublane packing

    # Pick tile_rows from a VMEM budget.  Budget in 4-byte units since the
    # in-kernel intermediates are f32 regardless of the input dtype.
    raw = max(target_block_bytes // (hw * 4), 1)
    if raw >= 128:
        # Preferred path: tile_rows a multiple of 128 -> unmasked lane-dense
        # output stores and valid sublane tiling for any dtype.
        tile_rows = min((raw // 128) * 128, 2048)
    else:
        # Very large HW: fall back to sublane-aligned row tiles (block bytes
        # are already huge, so per-step overhead is amortized regardless).
        tile_rows = max((raw // sublane) * sublane, sublane)

    if rows <= tile_rows:
        # Single block covering the full row extent: no padding, no OOB reads.
        tile_rows = rows
    num_tiles = pl.cdiv(rows, tile_rows)

    kernel = functools.partial(
        _gem_kernel, p=float(p), eps=float(eps), inv_hw=1.0 / float(hw))

    cost = pl.CostEstimate(
        flops=4 * rows * hw,                 # clamp + 2 muls + reduce add per elem
        transcendentals=rows,                # one root per (n, c) row
        bytes_accessed=rows * hw * itemsize + rows * itemsize,
    )

    out = pl.pallas_call(
        kernel,
        out_shape=jax.ShapeDtypeStruct((num_tiles, tile_rows), x.dtype),
        grid_spec=pltpu.PrefetchScalarGridSpec(
            num_scalar_prefetch=0,
            grid=(num_tiles,),
            in_specs=[pl.BlockSpec((tile_rows, hw), lambda i: (i, 0))],
            out_specs=pl.BlockSpec((1, tile_rows), lambda i: (i, 0)),
        ),
        compiler_params=pltpu.CompilerParams(
            dimension_semantics=("parallel",),
            # Explicit scoped-VMEM limit: > v5e's 16 MiB default, equal to the
            # v6e/v7x default, and comfortably above our usage
            # (2 x ~4 MiB double-buffered input + a few f32 intermediates).
            vmem_limit_bytes=32 * 1024 * 1024,
        ),
        cost_estimate=cost,
    )(x2d)

    # Flatten tiles, drop any tail rows from the last (padded) block.
    return out.reshape(-1)[:rows].reshape(n, c, 1, 1)


def _reference(x, p=3.0, eps=1e-6):
    # NOTE: jnp.maximum instead of the removed jnp.clip(a_min=...) kwarg.
    xc = jnp.maximum(x.astype(jnp.float32), eps) ** p
    m = jnp.mean(xc, axis=(2, 3), keepdims=True)
    return (m ** (1.0 / p)).astype(x.dtype)


if __name__ == "__main__":
    key = jax.random.PRNGKey(0)
    # GeneralizedMeanPoolingP(norm=3) -> p=3.0, output_size=1, eps=1e-6
    p, eps = 3.0, 1e-6
    N, C, H, W = 2, 4, 16, 16
    x = jax.random.normal(key, (N, C, H, W), dtype=jnp.float32)

    y = generalized_mean_pooling(x, p=p, eps=eps)
    jax.block_until_ready(y)

    y_ref = _reference(x, p=p, eps=eps)
    assert y.shape == (N, C, 1, 1), y.shape
    assert jnp.allclose(y, y_ref, atol=1e-4, rtol=1e-4), (
        float(jnp.max(jnp.abs(y.astype(jnp.float32) - y_ref.astype(jnp.float32))))
    )
    print("KERNEL_OK")
</pallas_src>

<mosaic_0001>
module attributes {stable_mosaic.version = 11 : i64} {
  func.func @_gem_kernel(%arg0: i32, %arg1: memref<8x256xf32, #tpu.memory_space<vmem>>, %arg2: memref<1x8xf32, #tpu.memory_space<vmem>>) attributes {dimension_semantics = [#tpu.dimension_semantics<parallel>], iteration_bounds = array<i64: 1>, scalar_prefetch = 0 : i64, scratch_operands = 0 : i64, tpu.core_type = #tpu.core_type<tc>, window_params = [{transform_indices = @transform_0, window_bounds = array<i64: 8, 256>}, {transform_indices = @transform_1, window_bounds = array<i64: 1, 8>}]} {
    %c0 = arith.constant 0 : index
    %c0_0 = arith.constant 0 : index
    %0 = vector.load %arg1[%c0, %c0_0] : memref<8x256xf32, #tpu.memory_space<vmem>>, vector<8x256xf32>
    %cst = arith.constant 9.99999997E-7 : f32
    %1 = vector.broadcast %cst : f32 to vector<8x256xf32>
    %2 = arith.maximumf %0, %1 : vector<8x256xf32>
    %3 = arith.mulf %2, %2 : vector<8x256xf32>
    %4 = arith.mulf %2, %3 : vector<8x256xf32>
    %cst_1 = arith.constant dense<0.000000e+00> : vector<8xf32>
    %5 = vector.multi_reduction <add>, %4, %cst_1 [1] : vector<8x256xf32> to vector<8xf32>
    %cst_2 = arith.constant 3.906250e-03 : f32
    %6 = vector.broadcast %cst_2 : f32 to vector<8xf32>
    %7 = arith.mulf %5, %6 : vector<8xf32>
    %cst_3 = arith.constant 0.333333343 : f32
    %8 = vector.broadcast %cst_3 : f32 to vector<8xf32>
    %9 = math.powf %7, %8 : vector<8xf32>
    %c0_4 = arith.constant 0 : index
    %c0_5 = arith.constant 0 : index
    %10 = vector.load %arg2[%c0_4, %c0_5] : memref<1x8xf32, #tpu.memory_space<vmem>>, vector<1x8xf32>
    %11 = vector.shape_cast %10 : vector<1x8xf32> to vector<8xf32>
    %12 = vector.shape_cast %9 : vector<8xf32> to vector<1x8xf32>
    tpu.vector_store %arg2[%c0_4, %c0_5], %12 {strides = array<i32>} : memref<1x8xf32, #tpu.memory_space<vmem>>, vector<1x8xf32>,
    return
  }
  func.func @transform_0(%arg0: i32) -> (i32, i32) {
    %c0_i32 = arith.constant 0 : i32
    %c0_i32_0 = arith.constant 0 : i32
    return %arg0, %c0_i32 : i32, i32
  }
  func.func @transform_1(%arg0: i32) -> (i32, i32) {
    %c0_i32 = arith.constant 0 : i32
    %c0_i32_0 = arith.constant 0 : i32
    return %arg0, %c0_i32 : i32, i32
  }
}

</mosaic_0001>

<llo_original>
// kernel: tpu_custom_call.1
$region0: #{tpu_custom_call.1}
  #allocation0 [shape = 'u32[]', space=smem, size = 0x4, offset = 0x4, fixed_abs, tag = 'smem constant byte address 0x4 - core index']
  #allocation1 [shape = 'u32[144,128]{1,0:T(1,128)}', space=vmem, size = 0x12000, scoped, tag = 'internal scratch']
  %s0 = inlined_call_operand.hbm [shape: f32[8,256], index: 0, kind: input, shape index: {}]
  %s1 = inlined_call_operand.hbm [shape: f32[1,8], index: 1, kind: output, shape index: {}]
  %s2 = sld [smem:[#allocation0]]
  $region18: #{tpu_custom_call.1} parent=0
    _
  %s4 = ssub.s32 1, %s2
  %s5 = scalar_select 0, %s4, %s2
  $region1: #{tpu_custom_call.1} parent=0
    #allocation2 [shape = 'u8[8192]{0}', space=vmem, size = 0x2000, scoped, tag = 'input window, operand 0, single buffered']
    #allocation3 [shape = 's32[1]{0}', space=sflag, size = 0x4, scoped, tag = 'scoped memory for tpu_custom_call.1']
    #allocation4 [shape = 's32[1]{0}', space=sflag, size = 0x4, scoped, tag = 'scoped memory for tpu_custom_call.1']
    #allocation5 [shape = 'u8[512]{0}', space=vmem, size = 0x400, scoped, tag = 'output window, operand 0, single buffered']
    %6 = vsyncpa [#allocation3], 0
    %7 = vsyncpa [#allocation4], 0
    // Predicated region
    $region2: #{tpu_custom_call.1} parent=1 // pred_check
      _
    $region3: #{tpu_custom_call.1} parent=1 // pred_check_branch
      %9 = sbr.rel (0) target = $region5
    $region4: #{tpu_custom_call.1} parent=1 // pred_region
      %s11 = ssub.s32 256, 256
      %12 = vsyncadd [#allocation3], %s11
      %s14 = sshll.u32 [#allocation2], 4
      %s15 = int_to_ptr.vmem [resolvable:$true] %s14
      %17 = dma.hbm_to_vmem [thread:$0]  %s0, 256, %s15, [#allocation3]
    $region5: #{tpu_custom_call.1} parent=1 // pred_fallthru
      _
    // Predicated region
    $region6: #{tpu_custom_call.1} parent=1 // pred_check
      _
    $region7: #{tpu_custom_call.1} parent=1 // pred_check_branch
      %19 = sbr.rel (0) target = $region9
    $region8: #{tpu_custom_call.1} parent=1 // pred_region
      %20 = dma.done [#allocation3], 256
    $region9: #{tpu_custom_call.1} parent=1 // pred_fallthru
      _
    %v21 = vld [vmem:[#allocation2] sm:$0xff]
    %v22 = vld [vmem:[#allocation2 + $0x8] sm:$0xff]
    %v23 = vmax.f32 %v21, 1e-06
    %v24 = vmax.f32 %v22, 1e-06
    %v25 = vmul.f32 %v23, %v23
    %v26 = vmul.f32 %v24, %v24
    %v27 = vmul.f32 %v23, %v25
    %v28 = vmul.f32 %v24, %v26
    %v29 = vadd.f32 %v27, %v28
    %30 = vadd.xlane.f32.xlu0 %v29
    %v31 = vpop.xlane.xlu0 %30
    %v32 = vmul.f32 %v31, 0.00390625
    %v33 = vpow.f32 %v32, 0.33333334
    %v35 = vlaneseq
    %v36 = vand.u32 %v35, 127
    %v37 = vlaneseq
    %v38 = vshrl.u32 %v37, 7
    %v39 = vsub.s32 %v36, %v38
    %v40 = vrot.slane %v33, %v39
    %vm42 = vcmask 57344
    %43 = vst.msk [vmem:[#allocation5] sm:$0x1] %vm42, %v40
    // Predicated region
    $region10: #{tpu_custom_call.1} parent=1 // pred_check
      _
    $region11: #{tpu_custom_call.1} parent=1 // pred_check_branch
      %45 = sbr.rel (0) target = $region13
    $region12: #{tpu_custom_call.1} parent=1 // pred_region
      %s47 = ssub.s32 16, 16
      %48 = vsyncadd [#allocation4], %s47
      %s50 = sshll.u32 [#allocation5], 4
      %s51 = int_to_ptr.vmem [resolvable:$true] %s50
      %53 = dma.vmem_to_hbm [thread:$0]  %s51, 16, %s1, [#allocation4]
    $region13: #{tpu_custom_call.1} parent=1 // pred_fallthru
      _
    // Predicated region
    $region14: #{tpu_custom_call.1} parent=1 // pred_check
      _
    $region15: #{tpu_custom_call.1} parent=1 // pred_check_branch
      %55 = sbr.rel (0) target = $region17
    $region16: #{tpu_custom_call.1} parent=1 // pred_region
      %56 = dma.done [#allocation4], 16
    $region17: #{tpu_custom_call.1} parent=1 // pred_fallthru
      _
    %57 = vsyncpa [#allocation3], 1
    %58 = vsyncpa [#allocation4], 1

</llo_original>
